<compile_context>
chip_gen: v7x
topology: tpu7x:2x2x1
jax: 0.10.0
libtpu: 0.0.40
codegen_flags: <defaults>
</compile_context>

<pallas_src>
import jax
import jax.numpy as jnp
from jax.experimental import pallas as pl
from jax.experimental.pallas import tpu as pltpu

ALPHABET_SIZE = 5
FEATURES = 1
OUT_SIZE = 20
WS = 300

IN_DIM = WS * FEATURES              # 300
OUT_DIM = OUT_SIZE * ALPHABET_SIZE  # 100
OUT_PAD = 128                       # lane-dense padded output width
MAX_TB = 512                        # batch tile (rows per grid step)


def _linear_kernel(x_ref, wt_ref, b_ref, o_ref):
    # x_ref:  (TB, IN_DIM)       float32
    # wt_ref: (IN_DIM, OUT_PAD)  float32  (transposed + zero-padded weight)
    # b_ref:  (1, OUT_PAD)       float32  (zero-padded bias)
    # o_ref:  (TB, OUT_PAD)      float32
    acc = jnp.dot(x_ref[...], wt_ref[...], preferred_element_type=jnp.float32)
    o_ref[...] = (acc + b_ref[...]).astype(o_ref.dtype)


def prepare_params(weight, bias):
    """One-time prep: transpose weight and pad the output dim to 128 lanes.

    weight: (OUT_DIM, IN_DIM), bias: (OUT_DIM,)  ->  (IN_DIM, OUT_PAD), (1, OUT_PAD)
    """
    wt = weight.T.astype(jnp.float32)                                   # (IN_DIM, OUT_DIM)
    wt_pad = jnp.zeros((IN_DIM, OUT_PAD), jnp.float32).at[:, :OUT_DIM].set(wt)
    b_pad = jnp.zeros((1, OUT_PAD), jnp.float32).at[0, :OUT_DIM].set(
        bias.astype(jnp.float32))
    return wt_pad, b_pad


def teacher_forward(xb, wt_pad, b_pad):
    """xb: (bs, WS, FEATURES); wt_pad: (IN_DIM, OUT_PAD); b_pad: (1, OUT_PAD)."""
    bs = xb.shape[0]
    x2d = xb.reshape(bs, -1).astype(jnp.float32)           # (bs, IN_DIM)

    # Pad batch up to a multiple of 8 (sublane) so every block is well formed.
    bs_pad = ((bs + 7) // 8) * 8
    if bs_pad != bs:
        x2d = jnp.pad(x2d, ((0, bs_pad - bs), (0, 0)))

    tb = min(MAX_TB, bs_pad)                                # batch tile
    grid = (pl.cdiv(bs_pad, tb),)

    # Double-buffered x & out tiles + resident weight/bias, with headroom.
    vmem_bytes = 2 * (tb * IN_DIM * 4 + tb * OUT_PAD * 4) \
        + (IN_DIM * OUT_PAD + OUT_PAD) * 4
    vmem_limit = min(max(2 * vmem_bytes, 4 * 1024 * 1024), 64 * 1024 * 1024)

    cost = pl.CostEstimate(
        flops=2 * bs_pad * IN_DIM * OUT_PAD,
        transcendentals=0,
        bytes_accessed=bs_pad * IN_DIM * 4
        + IN_DIM * OUT_PAD * 4
        + bs_pad * OUT_PAD * 4,
    )

    out_pad = pl.pallas_call(
        _linear_kernel,
        out_shape=jax.ShapeDtypeStruct((bs_pad, OUT_PAD), jnp.float32),
        grid_spec=pltpu.PrefetchScalarGridSpec(
            num_scalar_prefetch=0,
            grid=grid,
            in_specs=[
                pl.BlockSpec((tb, IN_DIM), lambda i: (i, 0)),       # x tile streams
                pl.BlockSpec((IN_DIM, OUT_PAD), lambda i: (0, 0)),  # W^T resident
                pl.BlockSpec((1, OUT_PAD), lambda i: (0, 0)),       # bias resident
            ],
            out_specs=pl.BlockSpec((tb, OUT_PAD), lambda i: (i, 0)),
        ),
        compiler_params=pltpu.CompilerParams(
            dimension_semantics=("parallel",),      # 2x on v7x megacore
            vmem_limit_bytes=vmem_limit,
        ),
        cost_estimate=cost,
    )(x2d, wt_pad, b_pad)

    # Drop batch padding and the 28 zero output lanes, then reshape.
    return out_pad[:bs, :OUT_DIM].reshape(bs, OUT_SIZE, ALPHABET_SIZE)


def init_params(key):
    # Deterministic init mirroring nn.Linear default: U(-1/sqrt(fan_in), 1/sqrt(fan_in))
    kw, kb = jax.random.split(key)
    bound = 1.0 / jnp.sqrt(jnp.float32(IN_DIM))
    weight = jax.random.uniform(kw, (OUT_DIM, IN_DIM), jnp.float32, -bound, bound)
    bias = jax.random.uniform(kb, (OUT_DIM,), jnp.float32, -bound, bound)
    return weight, bias


if __name__ == "__main__":
    key = jax.random.PRNGKey(0)
    kx, kp = jax.random.split(key)

    batch = 2
    xb = jax.random.normal(kx, (batch, WS, FEATURES), dtype=jnp.float32)
    weight, bias = init_params(kp)

    # Param prep (transpose + pad) done once, outside the per-call path.
    wt_pad, b_pad = prepare_params(weight, bias)

    out = teacher_forward(xb, wt_pad, b_pad)
    out = jax.block_until_ready(out)

    # Reference check in plain JAX
    ref = (xb.reshape(batch, -1) @ weight.T + bias).reshape(
        batch, OUT_SIZE, ALPHABET_SIZE)
    assert out.shape == (batch, OUT_SIZE, ALPHABET_SIZE), out.shape
    assert jnp.allclose(out, ref, atol=1e-5, rtol=1e-5), "mismatch vs reference"

    print("KERNEL_OK")
</pallas_src>

<mosaic_0001>
module attributes {stable_mosaic.version = 11 : i64} {
  func.func @_linear_kernel(%arg0: i32, %arg1: memref<8x300xf32, #tpu.memory_space<vmem>>, %arg2: memref<300x128xf32, #tpu.memory_space<vmem>>, %arg3: memref<1x128xf32, #tpu.memory_space<vmem>>, %arg4: memref<8x128xf32, #tpu.memory_space<vmem>>) attributes {dimension_semantics = [#tpu.dimension_semantics<parallel>], iteration_bounds = array<i64: 1>, scalar_prefetch = 0 : i64, scratch_operands = 0 : i64, tpu.core_type = #tpu.core_type<tc>, window_params = [{transform_indices = @transform_0, window_bounds = array<i64: 8, 300>}, {pipeline_mode = #tpu.pipeline_mode<synchronous>, transform_indices = @transform_1, window_bounds = array<i64: 300, 128>}, {pipeline_mode = #tpu.pipeline_mode<synchronous>, transform_indices = @transform_2, window_bounds = array<i64: 1, 128>}, {transform_indices = @transform_3, window_bounds = array<i64: 8, 128>}]} {
    %c0 = arith.constant 0 : index
    %c0_0 = arith.constant 0 : index
    %0 = vector.load %arg1[%c0, %c0_0] : memref<8x300xf32, #tpu.memory_space<vmem>>, vector<8x300xf32>
    %c0_1 = arith.constant 0 : index
    %c0_2 = arith.constant 0 : index
    %1 = vector.load %arg2[%c0_1, %c0_2] : memref<300x128xf32, #tpu.memory_space<vmem>>, vector<300x128xf32>
    %cst = arith.constant dense<0.000000e+00> : vector<8x128xf32>
    %2 = tpu.matmul %0, %1, %cst {dimension_numbers = #tpu.dot_dimension_numbers<[1], [0], [0], [1], [0, 0, 1, 1], [], []>} : vector<8x300xf32>, vector<300x128xf32>, vector<8x128xf32> -> vector<8x128xf32>
    %c0_3 = arith.constant 0 : index
    %c0_4 = arith.constant 0 : index
    %3 = vector.load %arg3[%c0_3, %c0_4] : memref<1x128xf32, #tpu.memory_space<vmem>>, vector<1x128xf32>
    %4 = vector.broadcast %3 : vector<1x128xf32> to vector<8x128xf32>
    %5 = arith.addf %2, %4 : vector<8x128xf32>
    %c0_5 = arith.constant 0 : index
    %c0_6 = arith.constant 0 : index
    %6 = vector.load %arg4[%c0_5, %c0_6] : memref<8x128xf32, #tpu.memory_space<vmem>>, vector<8x128xf32>
    tpu.vector_store %arg4[%c0_5, %c0_6], %5 {strides = array<i32>} : memref<8x128xf32, #tpu.memory_space<vmem>>, vector<8x128xf32>,
    return
  }
  func.func @transform_0(%arg0: i32) -> (i32, i32) {
    %c0_i32 = arith.constant 0 : i32
    %c0_i32_0 = arith.constant 0 : i32
    return %arg0, %c0_i32 : i32, i32
  }
  func.func @transform_1(%arg0: i32) -> (i32, i32) {
    %c0_i32 = arith.constant 0 : i32
    %c0_i32_0 = arith.constant 0 : i32
    %c0_i32_1 = arith.constant 0 : i32
    return %c0_i32, %c0_i32_0 : i32, i32
  }
  func.func @transform_2(%arg0: i32) -> (i32, i32) {
    %c0_i32 = arith.constant 0 : i32
    %c0_i32_0 = arith.constant 0 : i32
    %c0_i32_1 = arith.constant 0 : i32
    return %c0_i32, %c0_i32_0 : i32, i32
  }
  func.func @transform_3(%arg0: i32) -> (i32, i32) {
    %c0_i32 = arith.constant 0 : i32
    %c0_i32_0 = arith.constant 0 : i32
    return %arg0, %c0_i32 : i32, i32
  }
}

</mosaic_0001>

<llo_original>
// kernel: tpu_custom_call.1
$region0: #{tpu_custom_call.1}
  #allocation0 [shape = 'u32[]', space=smem, size = 0x4, offset = 0x4, fixed_abs, tag = 'smem constant byte address 0x4 - core index']
  #allocation1 [shape = 'u32[144,128]{1,0:T(1,128)}', space=vmem, size = 0x12000, scoped, tag = 'internal scratch']
  %s0 = inlined_call_operand.hbm [shape: f32[8,300], index: 0, kind: input, shape index: {}]
  %s1 = inlined_call_operand.hbm [shape: f32[300,128], index: 1, kind: input, shape index: {}]
  %s2 = inlined_call_operand.vmem [shape: f32[1,128], index: 2, kind: input, shape index: {}]
  %s3 = inlined_call_operand.hbm [shape: f32[8,128], index: 3, kind: output, shape index: {}]
  %s4 = sld [smem:[#allocation0]]
  $region30: #{tpu_custom_call.1} parent=0
    _
  %s6 = ssub.s32 1, %s4
  %s7 = scalar_select 0, %s6, %s4
  $region1: #{tpu_custom_call.1} parent=0
    #allocation2 [shape = 'u8[12288]{0}', space=vmem, size = 0x3000, scoped, tag = 'input window, operand 0, single buffered']
    #allocation3 [shape = 's32[1]{0}', space=sflag, size = 0x4, scoped, tag = 'scoped memory for tpu_custom_call.1']
    #allocation4 [shape = 's32[1]{0}', space=sflag, size = 0x4, scoped, tag = 'scoped memory for tpu_custom_call.1']
    #allocation5 [shape = 'u8[155648]{0}', space=vmem, size = 0x26000, scoped, tag = 'input window, operand 1, single buffered']
    #allocation6 [shape = 's32[1]{0}', space=sflag, size = 0x4, scoped, tag = 'scoped memory for tpu_custom_call.1']
    #allocation7 [shape = 'u8[4096]{0}', space=vmem, size = 0x1000, scoped, tag = 'output window, operand 0, single buffered']
    %8 = vsyncpa [#allocation3], 0
    %9 = vsyncpa [#allocation6], 0
    %10 = vsyncpa [#allocation4], 0
    // Predicated region
    $region2: #{tpu_custom_call.1} parent=1 // pred_check
      _
    $region3: #{tpu_custom_call.1} parent=1 // pred_check_branch
      %12 = sbr.rel (0) target = $region5
    $region4: #{tpu_custom_call.1} parent=1 // pred_region
      %s14 = ssub.s32 384, 384
      %15 = vsyncadd [#allocation3], %s14
      %s17 = sshll.u32 [#allocation2], 4
      %s18 = int_to_ptr.vmem [resolvable:$true] %s17
      %20 = dma.hbm_to_vmem [thread:$0]  %s0, 384, %s18, [#allocation3]
    $region5: #{tpu_custom_call.1} parent=1 // pred_fallthru
      _
    // Predicated region
    $region6: #{tpu_custom_call.1} parent=1 // pred_check
      _
    $region7: #{tpu_custom_call.1} parent=1 // pred_check_branch
      %22 = sbr.rel (0) target = $region9
    $region8: #{tpu_custom_call.1} parent=1 // pred_region
      %s24 = ssub.s32 4864, 4864
      %25 = vsyncadd [#allocation6], %s24
      %s26 = sshll.u32 [#allocation5], 4
      %s27 = int_to_ptr.vmem [resolvable:$true] %s26
      %32 = dma.hbm_to_vmem [thread:$0]  %s1, 4864, %s27, [#allocation6], 128, 128, 8
    $region9: #{tpu_custom_call.1} parent=1 // pred_fallthru
      _
    // Predicated region
    $region10: #{tpu_custom_call.1} parent=1 // pred_check
      _
    $region11: #{tpu_custom_call.1} parent=1 // pred_check_branch
      %34 = sbr.rel (0) target = $region13
    $region12: #{tpu_custom_call.1} parent=1 // pred_region
      _
    $region13: #{tpu_custom_call.1} parent=1 // pred_fallthru
      _
    // Predicated region
    $region14: #{tpu_custom_call.1} parent=1 // pred_check
      _
    $region15: #{tpu_custom_call.1} parent=1 // pred_check_branch
      %36 = sbr.rel (0) target = $region17
    $region16: #{tpu_custom_call.1} parent=1 // pred_region
      %37 = dma.done [#allocation3], 384
    $region17: #{tpu_custom_call.1} parent=1 // pred_fallthru
      _
    // Predicated region
    $region18: #{tpu_custom_call.1} parent=1 // pred_check
      _
    $region19: #{tpu_custom_call.1} parent=1 // pred_check_branch
      %39 = sbr.rel (0) target = $region21
    $region20: #{tpu_custom_call.1} parent=1 // pred_region
      %40 = dma.done [#allocation6], 4864
    $region21: #{tpu_custom_call.1} parent=1 // pred_fallthru
      _
    %v41 = vld [vmem:[#allocation2] sm:$0xff]
    %v42 = vld [vmem:[#allocation2 + $0x8] sm:$0xff]
    %v43 = vld [vmem:[#allocation2 + $0x10] sm:$0xff]
    %v44 = vld [vmem:[#allocation5] sm:$0xff]
    %v45 = vld [vmem:[#allocation5 + $0x8] sm:$0xff]
    %v46 = vld [vmem:[#allocation5 + $0x10] sm:$0xff]
    %v47 = vld [vmem:[#allocation5 + $0x18] sm:$0xff]
    %v48 = vld [vmem:[#allocation5 + $0x20] sm:$0xff]
    %v49 = vld [vmem:[#allocation5 + $0x28] sm:$0xff]
    %v50 = vld [vmem:[#allocation5 + $0x30] sm:$0xff]
    %v51 = vld [vmem:[#allocation5 + $0x38] sm:$0xff]
    %v52 = vld [vmem:[#allocation5 + $0x40] sm:$0xff]
    %v53 = vld [vmem:[#allocation5 + $0x48] sm:$0xff]
    %v54 = vld [vmem:[#allocation5 + $0x50] sm:$0xff]
    %v55 = vld [vmem:[#allocation5 + $0x58] sm:$0xff]
    %v56 = vld [vmem:[#allocation5 + $0x60] sm:$0xff]
    %v57 = vld [vmem:[#allocation5 + $0x68] sm:$0xff]
    %v58 = vld [vmem:[#allocation5 + $0x70] sm:$0xff]
    %v59 = vld [vmem:[#allocation5 + $0x78] sm:$0xff]
    %v60 = vld [vmem:[#allocation5 + $0x80] sm:$0xff]
    %v61 = vld [vmem:[#allocation5 + $0x88] sm:$0xff]
    %v62 = vld [vmem:[#allocation5 + $0x90] sm:$0xff]
    %v63 = vld [vmem:[#allocation5 + $0x98] sm:$0xff]
    %v64 = vld [vmem:[#allocation5 + $0xa0] sm:$0xff]
    %v65 = vld [vmem:[#allocation5 + $0xa8] sm:$0xff]
    %v66 = vld [vmem:[#allocation5 + $0xb0] sm:$0xff]
    %v67 = vld [vmem:[#allocation5 + $0xb8] sm:$0xff]
    %v68 = vld [vmem:[#allocation5 + $0xc0] sm:$0xff]
    %v69 = vld [vmem:[#allocation5 + $0xc8] sm:$0xff]
    %v70 = vld [vmem:[#allocation5 + $0xd0] sm:$0xff]
    %v71 = vld [vmem:[#allocation5 + $0xd8] sm:$0xff]
    %v72 = vld [vmem:[#allocation5 + $0xe0] sm:$0xff]
    %v73 = vld [vmem:[#allocation5 + $0xe8] sm:$0xff]
    %v74 = vld [vmem:[#allocation5 + $0xf0] sm:$0xff]
    %v75 = vld [vmem:[#allocation5 + $0xf8] sm:$0xff]
    %v76 = vld [vmem:[#allocation5 + $0x100] sm:$0xff]
    %v77 = vld [vmem:[#allocation5 + $0x108] sm:$0xff]
    %v78 = vld [vmem:[#allocation5 + $0x110] sm:$0xff]
    %v79 = vld [vmem:[#allocation5 + $0x118] sm:$0xff]
    %v80 = vld [vmem:[#allocation5 + $0x120] sm:$0xff]
    %v81 = vld [vmem:[#allocation5 + $0x128] sm:$0xf]
    %v82 = vld [vmem:[%s2] sm:$0x1]
    %v84 = vlaneseq
    %v85 = vshrl.u32 %v84, 7
    %v86 = vsub.s32 0, %v85
    %v87 = vrot.slane %v82, %v86
    %vm89 = vcmask 359424
    %v91 = vsel %vm89, %v43, 0
    %vm93 = vcmask 1043456
    %v95 = vsel %vm93, %v81, 0
    %97 = vmatprep.subr.mxu0 0.0
    %98 = vmatpush1.msra.mxu0 %v44
    %99 = vmatprep.subr.mxu0 0.0
    %100 = vmatpush1.msra.mxu0 %v45
    %101 = vmatprep.subr.mxu0 0.0
    %102 = vmatpush1.msra.mxu0 %v46
    %103 = vmatprep.subr.mxu0 0.0
    %104 = vmatpush1.msra.mxu0 %v47
    %105 = vmatprep.subr.mxu0 0.0
    %106 = vmatpush1.msra.mxu0 %v48
    %107 = vmatprep.subr.mxu0 0.0
    %108 = vmatpush1.msra.mxu0 %v49
    %109 = vmatprep.subr.mxu0 0.0
    %110 = vmatpush1.msra.mxu0 %v50
    %111 = vmatprep.subr.mxu0 0.0
    %112 = vmatpush1.msra.mxu0 %v51
    %113 = vmatprep.subr.mxu0 0.0
    %114 = vmatpush1.msra.mxu0 %v52
    %115 = vmatprep.subr.mxu0 0.0
    %116 = vmatpush1.msra.mxu0 %v53
    %117 = vmatprep.subr.mxu0 0.0
    %118 = vmatpush1.msra.mxu0 %v54
    %119 = vmatprep.subr.mxu0 0.0
    %120 = vmatpush1.msra.mxu0 %v55
    %121 = vmatprep.subr.mxu0 0.0
    %122 = vmatpush1.msra.mxu0 %v56
    %123 = vmatprep.subr.mxu0 0.0
    %124 = vmatpush1.msra.mxu0 %v57
    %125 = vmatprep.subr.mxu0 0.0
    %126 = vmatpush1.msra.mxu0 %v58
    %127 = vmatprep.subr.mxu0 0.0
    %128 = vmatpush1.msra.mxu0 %v59
    %129 = vmatprep.subr.mxu0 0.0
    %130 = vmatpush1.msra.mxu0 %v60
    %131 = vmatprep.subr.mxu0 0.0
    %132 = vmatpush1.msra.mxu0 %v61
    %133 = vmatprep.subr.mxu0 0.0
    %134 = vmatpush1.msra.mxu0 %v62
    %135 = vmatprep.subr.mxu0 0.0
    %136 = vmatpush1.msra.mxu0 %v63
    %137 = vmatprep.subr.mxu0 0.0
    %138 = vmatpush1.msra.mxu0 %v64
    %139 = vmatprep.subr.mxu0 0.0
    %140 = vmatpush1.msra.mxu0 %v65
    %141 = vmatprep.subr.mxu0 0.0
    %142 = vmatpush1.msra.mxu0 %v66
    %143 = vmatprep.subr.mxu0 0.0
    %144 = vmatpush1.msra.mxu0 %v67
    %145 = vmatprep.subr.mxu0 0.0
    %146 = vmatpush1.msra.mxu0 %v68
    %147 = vmatprep.subr.mxu0 0.0
    %148 = vmatpush1.msra.mxu0 %v69
    %149 = vmatprep.subr.mxu0 0.0
    %150 = vmatpush1.msra.mxu0 %v70
    %151 = vmatprep.subr.mxu0 0.0
    %152 = vmatpush1.msra.mxu0 %v71
    %153 = vmatprep.subr.mxu0 0.0
    %154 = vmatpush1.msra.mxu0 %v72
    %155 = vmatprep.subr.mxu0 0.0
    %156 = vmatpush1.msra.mxu0 %v73
    %157 = vmatprep.subr.mxu0 0.0
    %158 = vmatpush1.msra.mxu0 %v74
    %159 = vmatprep.subr.mxu0 0.0
    %160 = vmatpush1.msra.mxu0 %v75
    %161 = vmatprep.mubr.f32.mxu0 %v42
    %162 = vmatmul.mubr.f32.gmra.mrb[0].mxu0 %v41
    %v163 = vpop.f32.mrb[0].mxu0
    %v164 = vadd.f32 %v87, %v163
    %v165 = vpop.f32.mrb[0].mxu0
    %166 = vdwg.mxu0
    %167 = vmatprep.subr.mxu0 0.0
    %168 = vmatpush1.msra.mxu0 %v76
    %169 = vmatprep.subr.mxu0 0.0
    %170 = vmatpush1.msra.mxu0 %v77
    %171 = vmatprep.subr.mxu0 0.0
    %172 = vmatpush1.msra.mxu0 %v78
    %173 = vmatprep.subr.mxu0 0.0
    %174 = vmatpush1.msra.mxu0 %v79
    %175 = vmatprep.subr.mxu0 0.0
    %176 = vmatpush1.msra.mxu0 %v80
    %177 = vmatprep.subr.mxu0 0.0
    %178 = vmatpush1.msra.mxu0 %v95
    %179 = vmatprep.subr.mxu0 0.0
    %180 = vmatpush1.msra.mxu0 0.0
    %181 = vmatprep.subr.mxu0 0.0
    %182 = vmatpush1.msra.mxu0 0.0
    %183 = vmatprep.subr.mxu0 0.0
    %184 = vmatpush1.msra.mxu0 0.0
    %185 = vmatprep.subr.mxu0 0.0
    %186 = vmatpush1.msra.mxu0 0.0
    %187 = vmatprep.subr.mxu0 0.0
    %188 = vmatpush1.msra.mxu0 0.0
    %189 = vmatprep.subr.mxu0 0.0
    %190 = vmatpush1.msra.mxu0 0.0
    %191 = vmatprep.subr.mxu0 0.0
    %192 = vmatpush1.msra.mxu0 0.0
    %193 = vmatprep.subr.mxu0 0.0
    %194 = vmatpush1.msra.mxu0 0.0
    %195 = vmatprep.subr.mxu0 0.0
    %196 = vmatpush1.msra.mxu0 0.0
    %197 = vmatprep.subr.mxu0 0.0
    %198 = vmatpush1.msra.mxu0 0.0
    %199 = vmatprep.subr.mxu0 0.0
    %200 = vmatpush1.msra.mxu0 0.0
    %201 = vmatprep.subr.mxu0 0.0
    %202 = vmatpush1.msra.mxu0 0.0
    %203 = vmatprep.subr.mxu0 0.0
    %204 = vmatpush1.msra.mxu0 0.0
    %205 = vmatprep.subr.mxu0 0.0
    %206 = vmatpush1.msra.mxu0 0.0
    %207 = vmatprep.subr.mxu0 0.0
    %208 = vmatpush1.msra.mxu0 0.0
    %209 = vmatprep.subr.mxu0 0.0
    %210 = vmatpush1.msra.mxu0 0.0
    %211 = vmatprep.subr.mxu0 0.0
    %212 = vmatpush1.msra.mxu0 0.0
    %213 = vmatprep.subr.mxu0 0.0
    %214 = vmatpush1.msra.mxu0 0.0
    %215 = vmatprep.subr.mxu0 0.0
    %216 = vmatpush1.msra.mxu0 0.0
    %217 = vmatprep.subr.mxu0 0.0
    %218 = vmatpush1.msra.mxu0 0.0
    %219 = vmatprep.subr.mxu0 0.0
    %220 = vmatpush1.msra.mxu0 0.0
    %221 = vmatprep.subr.mxu0 0.0
    %222 = vmatpush1.msra.mxu0 0.0
    %223 = vmatprep.subr.mxu0 0.0
    %224 = vmatpush1.msra.mxu0 0.0
    %225 = vmatprep.subr.mxu0 0.0
    %226 = vmatpush1.msra.mxu0 0.0
    %227 = vmatprep.subr.mxu0 0.0
    %228 = vmatpush1.msra.mxu0 0.0
    %229 = vmatprep.subr.mxu0 0.0
    %230 = vmatpush1.msra.mxu0 0.0
    %231 = vmatprep.mubr.f32.mxu0 0.0
    %232 = vmatmul.mubr.f32.gmra.mrb[0].mxu0 %v91
    %v233 = vpop.f32.mrb[0].mxu0
    %v234 = vadd.f32 %v164, %v233
    %v235 = vpop.f32.mrb[0].mxu0
    %236 = vdwg.mxu0
    %237 = vst [vmem:[#allocation7] sm:$0xff] %v234
    // Predicated region
    $region22: #{tpu_custom_call.1} parent=1 // pred_check
      _
    $region23: #{tpu_custom_call.1} parent=1 // pred_check_branch
      %239 = sbr.rel (0) target = $region25
    $region24: #{tpu_custom_call.1} parent=1 // pred_region
      %s241 = ssub.s32 128, 128
      %242 = vsyncadd [#allocation4], %s241
      %s244 = sshll.u32 [#allocation7], 4
      %s245 = int_to_ptr.vmem [resolvable:$true] %s244
      %247 = dma.vmem_to_hbm [thread:$0]  %s245, 128, %s3, [#allocation4]
    $region25: #{tpu_custom_call.1} parent=1 // pred_fallthru
      _
    // Predicated region
    $region26: #{tpu_custom_call.1} parent=1 // pred_check
      _
    $region27: #{tpu_custom_call.1} parent=1 // pred_check_branch
      %249 = sbr.rel (0) target = $region29
    $region28: #{tpu_custom_call.1} parent=1 // pred_region
      %250 = dma.done [#allocation4], 128
    $region29: #{tpu_custom_call.1} parent=1 // pred_fallthru
      _
    %251 = vsyncpa [#allocation3], 1
    %252 = vsyncpa [#allocation6], 1
    %253 = vsyncpa [#allocation4], 1

</llo_original>
